<compile_context>
chip_gen: v7x
topology: tpu7x:2x2x1
jax: 0.10.0
libtpu: 0.0.40
codegen_flags: <defaults>
</compile_context>

<pallas_src>
import jax
import jax.numpy as jnp
from jax.experimental import pallas as pl
from jax.experimental.pallas import tpu as pltpu


def _mlp_kernel(x_ref, w1_ref, b1_ref, w2_ref, b2_ref, o_ref, acc_ref):
    j = pl.program_id(1)  # hidden-dim chunk index (reduction axis, last in grid)

    @pl.when(j == 0)
    def _():
        acc_ref[...] = jnp.zeros_like(acc_ref)

    # fc1 chunk: (TM, D_in) @ (D_in, Hc) on the MXU, f32 accumulation.
    h = jnp.dot(x_ref[...], w1_ref[...], preferred_element_type=jnp.float32)
    h = jnp.maximum(h + b1_ref[...], 0.0)          # bias row broadcasts over rows

    # fc2 contribution of this H chunk, accumulated into f32 VMEM scratch.
    # (astype is a no-op for the f32 model; matches parameter precision otherwise.)
    acc_ref[...] += jnp.dot(h.astype(w2_ref.dtype), w2_ref[...],
                            preferred_element_type=jnp.float32)

    @pl.when(j == pl.num_programs(1) - 1)
    def _():
        o_ref[...] = (acc_ref[...] + b2_ref[...]).astype(o_ref.dtype)


def _round_up(x, m):
    return ((x + m - 1) // m) * m


def _pick_h_chunk(H, cap=1024):
    """Chunk size along H: a multiple-of-128 divisor of H (<= cap), else H."""
    if H <= cap:
        return H
    c = (cap // 128) * 128
    while c >= 128:
        if H % c == 0:
            return c
        c -= 128
    # TODO(synk): mask the tail chunk for H with no multiple-of-128 divisor <= cap;
    # fall back to fully-resident weights for now.
    return H


def projection_head_target(x, w1, b1, w2, b2):
    """Fused fc1 -> relu -> fc2 (-> squeeze outside the kernel).

    x: (B, D_in); w1: (H, D_in); b1: (H,); w2: (D_out, H); b2: (D_out,)
    (PyTorch nn.Linear layout: weight (out, in), bias (out,)).
    """
    B, D_in = x.shape
    H, d_in_w = w1.shape
    D_out, h_w = w2.shape
    assert d_in_w == D_in and h_w == H
    assert b1.shape == (H,) and b2.shape == (D_out,)

    # One-time per-call layout fixups: contraction-major weights so the kernel
    # runs plain NN-form MXU matmuls (no per-step weight transposes), and a
    # lane-dense (128-padded) fc2 output when D_out is small.
    w1_t = w1.T                       # (D_in, H)
    w2_t = w2.T                       # (H, D_out)
    b1_2d = b1.reshape(1, H)
    b2_2d = b2.reshape(1, D_out)

    if D_out < 128:
        D_out_pad = 128
        w2_t = jnp.pad(w2_t, ((0, 0), (0, D_out_pad - D_out)))
        b2_2d = jnp.pad(b2_2d, ((0, 0), (0, D_out_pad - D_out)))
    else:
        # TODO(synk): D_out >= 128 but not a multiple of 128 still gets masked
        # tail stores; padding there would cost a near-full weight copy per call.
        D_out_pad = D_out

    # Row tiling: >= 2 tiles for B > 16 so v7x's second TensorCore gets work;
    # cap at 512 rows (amortizes per-step overhead on v5e/v6e).
    if B <= 16:
        TM = B
    else:
        TM = min(512, _round_up(pl.cdiv(B, 2), 8))
    n_rows = pl.cdiv(B, TM)
    # NOTE: when B % TM != 0 the padded tail rows compute on garbage input; this
    # is safe only because every output row depends solely on its own input row.

    H_chunk = _pick_h_chunk(H)
    n_h = H // H_chunk
    single = (n_h == 1)   # constant weight index maps -> single-buffer them

    # Explicit scoped-VMEM limit sized from residency + headroom, capped ~8 MiB
    # under physical VMEM (conservatively budget double-buffered weights).
    x_itm = jnp.dtype(x.dtype).itemsize
    w_itm = jnp.dtype(w1.dtype).itemsize
    needed = (
        2 * (D_in * H_chunk + H_chunk * D_out_pad) * w_itm   # W1/W2 chunks
        + 2 * 8 * (H_chunk + D_out_pad) * 4                  # bias rows (sublane-padded)
        + 2 * TM * (D_in + D_out_pad) * x_itm                # x / out tiles (double-buffered)
        + TM * D_out_pad * 4                                 # f32 accumulator scratch
        + TM * H_chunk * 4                                   # fc1 intermediate
    )
    try:
        phys_vmem = pltpu.get_tpu_info().vmem_capacity_bytes
    except Exception:
        phys_vmem = 64 << 20                                 # v7x per-core floor
    vmem_limit = int(min(phys_vmem - (8 << 20),
                         max(32 << 20, int(needed * 1.5) + (4 << 20))))

    cost = pl.CostEstimate(
        flops=2 * B * D_in * H + 2 * B * H * D_out,
        transcendentals=0,
        bytes_accessed=int(
            x.size * x_itm + B * D_out * x_itm
            + w1.size * w_itm + w2.size * jnp.dtype(w2.dtype).itemsize
            + b1.size * jnp.dtype(b1.dtype).itemsize
            + b2.size * jnp.dtype(b2.dtype).itemsize),
    )

    def make_call(single_buffer_weights):
        def wspec(shape, index_map):
            if single_buffer_weights:
                return pl.BlockSpec(shape, index_map, pipeline_mode=pl.Buffered(1))
            return pl.BlockSpec(shape, index_map)

        return pl.pallas_call(
            _mlp_kernel,
            out_shape=jax.ShapeDtypeStruct((B, D_out_pad), x.dtype),
            grid=(n_rows, n_h),
            in_specs=[
                pl.BlockSpec((TM, D_in), lambda i, j: (i, 0)),      # x row tile
                wspec((D_in, H_chunk), lambda i, j: (0, j)),         # W1^T chunk
                wspec((1, H_chunk), lambda i, j: (0, j)),            # b1 chunk
                wspec((H_chunk, D_out_pad), lambda i, j: (j, 0)),    # W2^T chunk
                wspec((1, D_out_pad), lambda i, j: (0, 0)),          # b2
            ],
            out_specs=pl.BlockSpec((TM, D_out_pad), lambda i, j: (i, 0)),
            scratch_shapes=[pltpu.VMEM((TM, D_out_pad), jnp.float32)],
            compiler_params=pltpu.CompilerParams(
                dimension_semantics=("parallel", "arbitrary"),
                vmem_limit_bytes=vmem_limit),
            cost_estimate=cost,
        )

    args = (x, w1_t, b1_2d, w2_t, b2_2d)
    if single:
        try:
            out_p = make_call(True)(*args)
        except Exception:
            # pl.Buffered(1) not supported by this JAX build -> fall back to
            # default double buffering (identical results, more VMEM).
            out_p = make_call(False)(*args)
    else:
        out_p = make_call(False)(*args)

    out = out_p[:, :D_out] if D_out_pad != D_out else out_p
    # PyTorch .squeeze(): drop all size-1 dims (pure reshape glue, outside kernel).
    return jnp.squeeze(out)


if __name__ == "__main__":
    key = jax.random.PRNGKey(0)
    B, D = 2, 32  # batch=2, input_dim=32

    k_x, k_w1, k_b1, k_w2, k_b2 = jax.random.split(key, 5)
    x = jax.random.normal(k_x, (B, D), dtype=jnp.float32)
    # nn.Linear-style init: weight (out, in), bias (out,)
    bound = 1.0 / (D ** 0.5)
    w1 = jax.random.uniform(k_w1, (D, D), jnp.float32, -bound, bound)
    b1 = jax.random.uniform(k_b1, (D,), jnp.float32, -bound, bound)
    w2 = jax.random.uniform(k_w2, (D, D), jnp.float32, -bound, bound)
    b2 = jax.random.uniform(k_b2, (D,), jnp.float32, -bound, bound)

    out = projection_head_target(x, w1, b1, w2, b2)
    out = jax.block_until_ready(out)

    # Pure-JAX reference
    ref = jnp.squeeze(jnp.maximum(x @ w1.T + b1, 0.0) @ w2.T + b2)
    assert out.shape == ref.shape, (out.shape, ref.shape)
    assert jnp.allclose(out, ref, atol=1e-5, rtol=1e-5), float(jnp.max(jnp.abs(out - ref)))

    print("KERNEL_OK")
</pallas_src>

<mosaic_0001>
module attributes {stable_mosaic.version = 11 : i64} {
  func.func @_mlp_kernel(%arg0: i32, %arg1: i32, %arg2: memref<2x32xf32, #tpu.memory_space<vmem>>, %arg3: memref<32x32xf32, #tpu.memory_space<vmem>>, %arg4: memref<1x32xf32, #tpu.memory_space<vmem>>, %arg5: memref<32x128xf32, #tpu.memory_space<vmem>>, %arg6: memref<1x128xf32, #tpu.memory_space<vmem>>, %arg7: memref<2x128xf32, #tpu.memory_space<vmem>>, %arg8: memref<2x128xf32, #tpu.memory_space<vmem>>) attributes {dimension_semantics = [#tpu.dimension_semantics<parallel>, #tpu.dimension_semantics<arbitrary>], iteration_bounds = array<i64: 1, 1>, scalar_prefetch = 0 : i64, scratch_operands = 1 : i64, tpu.core_type = #tpu.core_type<tc>, window_params = [{transform_indices = @transform_0, window_bounds = array<i64: 2, 32>}, {pipeline_mode = #tpu.pipeline_mode<synchronous>, transform_indices = @transform_1, window_bounds = array<i64: 32, 32>}, {pipeline_mode = #tpu.pipeline_mode<synchronous>, transform_indices = @transform_2, window_bounds = array<i64: 1, 32>}, {pipeline_mode = #tpu.pipeline_mode<synchronous>, transform_indices = @transform_3, window_bounds = array<i64: 32, 128>}, {pipeline_mode = #tpu.pipeline_mode<synchronous>, transform_indices = @transform_4, window_bounds = array<i64: 1, 128>}, {transform_indices = @transform_5, window_bounds = array<i64: 2, 128>}]} {
    %c0_i32 = arith.constant 0 : i32
    %0 = arith.cmpi eq, %arg1, %c0_i32 : i32
    %1 = arith.extui %0 : i1 to i32
    %c0_i32_0 = arith.constant 0 : i32
    %2 = arith.cmpi ne, %1, %c0_i32_0 : i32
    scf.if %2 {
      %cst_16 = arith.constant 0.000000e+00 : f32
      %19 = vector.broadcast %cst_16 : f32 to vector<2x128xf32>
      %c0_17 = arith.constant 0 : index
      %c0_18 = arith.constant 0 : index
      %20 = vector.load %arg8[%c0_17, %c0_18] : memref<2x128xf32, #tpu.memory_space<vmem>>, vector<2x128xf32>
      tpu.vector_store %arg8[%c0_17, %c0_18], %19 {strides = array<i32>} : memref<2x128xf32, #tpu.memory_space<vmem>>, vector<2x128xf32>,
    } else {
    }
    %c0 = arith.constant 0 : index
    %c0_1 = arith.constant 0 : index
    %3 = vector.load %arg2[%c0, %c0_1] : memref<2x32xf32, #tpu.memory_space<vmem>>, vector<2x32xf32>
    %c0_2 = arith.constant 0 : index
    %c0_3 = arith.constant 0 : index
    %4 = vector.load %arg3[%c0_2, %c0_3] : memref<32x32xf32, #tpu.memory_space<vmem>>, vector<32x32xf32>
    %cst = arith.constant dense<0.000000e+00> : vector<2x32xf32>
    %5 = tpu.matmul %3, %4, %cst {dimension_numbers = #tpu.dot_dimension_numbers<[1], [0], [0], [1], [0, 0, 1, 1], [], []>} : vector<2x32xf32>, vector<32x32xf32>, vector<2x32xf32> -> vector<2x32xf32>
    %c0_4 = arith.constant 0 : index
    %c0_5 = arith.constant 0 : index
    %6 = vector.load %arg4[%c0_4, %c0_5] : memref<1x32xf32, #tpu.memory_space<vmem>>, vector<1x32xf32>
    %7 = vector.broadcast %6 : vector<1x32xf32> to vector<2x32xf32>
    %8 = arith.addf %5, %7 : vector<2x32xf32>
    %cst_6 = arith.constant 0.000000e+00 : f32
    %9 = vector.broadcast %cst_6 : f32 to vector<2x32xf32>
    %10 = arith.maximumf %8, %9 : vector<2x32xf32>
    %c0_7 = arith.constant 0 : index
    %c0_8 = arith.constant 0 : index
    %11 = vector.load %arg8[%c0_7, %c0_8] : memref<2x128xf32, #tpu.memory_space<vmem>>, vector<2x128xf32>
    %c0_9 = arith.constant 0 : index
    %c0_10 = arith.constant 0 : index
    %12 = vector.load %arg5[%c0_9, %c0_10] : memref<32x128xf32, #tpu.memory_space<vmem>>, vector<32x128xf32>
    %cst_11 = arith.constant dense<0.000000e+00> : vector<2x128xf32>
    %13 = tpu.matmul %10, %12, %cst_11 {dimension_numbers = #tpu.dot_dimension_numbers<[1], [0], [0], [1], [0, 0, 1, 1], [], []>} : vector<2x32xf32>, vector<32x128xf32>, vector<2x128xf32> -> vector<2x128xf32>
    %14 = arith.addf %11, %13 : vector<2x128xf32>
    %c0_12 = arith.constant 0 : index
    %c0_13 = arith.constant 0 : index
    %15 = vector.load %arg8[%c0_12, %c0_13] : memref<2x128xf32, #tpu.memory_space<vmem>>, vector<2x128xf32>
    tpu.vector_store %arg8[%c0_12, %c0_13], %14 {strides = array<i32>} : memref<2x128xf32, #tpu.memory_space<vmem>>, vector<2x128xf32>,
    %c0_i32_14 = arith.constant 0 : i32
    %16 = arith.cmpi eq, %arg1, %c0_i32_14 : i32
    %17 = arith.extui %16 : i1 to i32
    %c0_i32_15 = arith.constant 0 : i32
    %18 = arith.cmpi ne, %17, %c0_i32_15 : i32
    scf.if %18 {
      %c0_16 = arith.constant 0 : index
      %c0_17 = arith.constant 0 : index
      %19 = vector.load %arg8[%c0_16, %c0_17] : memref<2x128xf32, #tpu.memory_space<vmem>>, vector<2x128xf32>
      %c0_18 = arith.constant 0 : index
      %c0_19 = arith.constant 0 : index
      %20 = vector.load %arg6[%c0_18, %c0_19] : memref<1x128xf32, #tpu.memory_space<vmem>>, vector<1x128xf32>
      %21 = vector.broadcast %20 : vector<1x128xf32> to vector<2x128xf32>
      %22 = arith.addf %19, %21 : vector<2x128xf32>
      %c0_20 = arith.constant 0 : index
      %c0_21 = arith.constant 0 : index
      %23 = vector.load %arg7[%c0_20, %c0_21] : memref<2x128xf32, #tpu.memory_space<vmem>>, vector<2x128xf32>
      tpu.vector_store %arg7[%c0_20, %c0_21], %22 {strides = array<i32>} : memref<2x128xf32, #tpu.memory_space<vmem>>, vector<2x128xf32>,
    } else {
    }
    return
  }
  func.func @transform_0(%arg0: i32, %arg1: i32) -> (i32, i32) {
    %c0_i32 = arith.constant 0 : i32
    %c0_i32_0 = arith.constant 0 : i32
    return %arg0, %c0_i32 : i32, i32
  }
  func.func @transform_1(%arg0: i32, %arg1: i32) -> (i32, i32) {
    %c0_i32 = arith.constant 0 : i32
    %c0_i32_0 = arith.constant 0 : i32
    return %c0_i32, %arg1 : i32, i32
  }
  func.func @transform_2(%arg0: i32, %arg1: i32) -> (i32, i32) {
    %c0_i32 = arith.constant 0 : i32
    %c0_i32_0 = arith.constant 0 : i32
    return %c0_i32, %arg1 : i32, i32
  }
  func.func @transform_3(%arg0: i32, %arg1: i32) -> (i32, i32) {
    %c0_i32 = arith.constant 0 : i32
    %c0_i32_0 = arith.constant 0 : i32
    return %arg1, %c0_i32 : i32, i32
  }
  func.func @transform_4(%arg0: i32, %arg1: i32) -> (i32, i32) {
    %c0_i32 = arith.constant 0 : i32
    %c0_i32_0 = arith.constant 0 : i32
    %c0_i32_1 = arith.constant 0 : i32
    return %c0_i32, %c0_i32_0 : i32, i32
  }
  func.func @transform_5(%arg0: i32, %arg1: i32) -> (i32, i32) {
    %c0_i32 = arith.constant 0 : i32
    %c0_i32_0 = arith.constant 0 : i32
    return %arg0, %c0_i32 : i32, i32
  }
}

module attributes {stable_mosaic.version = 11 : i64} {
  func.func @_mlp_kernel(%arg0: i32, %arg1: i32, %arg2: memref<2x32xf32, #tpu.memory_space<vmem>>, %arg3: memref<32x32xf32, #tpu.memory_space<vmem>>, %arg4: memref<1x32xf32, #tpu.memory_space<vmem>>, %arg5: memref<32x128xf32, #tpu.memory_space<vmem>>, %arg6: memref<1x128xf32, #tpu.memory_space<vmem>>, %arg7: memref<2x128xf32, #tpu.memory_space<vmem>>, %arg8: memref<2x128xf32, #tpu.memory_space<vmem>>) attributes {dimension_semantics = [#tpu.dimension_semantics<parallel>, #tpu.dimension_semantics<arbitrary>], iteration_bounds = array<i64: 1, 1>, scalar_prefetch = 0 : i64, scratch_operands = 1 : i64, tpu.core_type = #tpu.core_type<tc>, window_params = [{transform_indices = @transform_0, window_bounds = array<i64: 2, 32>}, {transform_indices = @transform_1, window_bounds = array<i64: 32, 32>}, {transform_indices = @transform_2, window_bounds = array<i64: 1, 32>}, {transform_indices = @transform_3, window_bounds = array<i64: 32, 128>}, {pipeline_mode = #tpu.pipeline_mode<synchronous>, transform_indices = @transform_4, window_bounds = array<i64: 1, 128>}, {transform_indices = @transform_5, window_bounds = array<i64: 2, 128>}]} {
    %c0_i32 = arith.constant 0 : i32
    %0 = arith.cmpi eq, %arg1, %c0_i32 : i32
    %1 = arith.extui %0 : i1 to i32
    %c0_i32_0 = arith.constant 0 : i32
    %2 = arith.cmpi ne, %1, %c0_i32_0 : i32
    scf.if %2 {
      %cst_16 = arith.constant 0.000000e+00 : f32
      %19 = vector.broadcast %cst_16 : f32 to vector<2x128xf32>
      %c0_17 = arith.constant 0 : index
      %c0_18 = arith.constant 0 : index
      %20 = vector.load %arg8[%c0_17, %c0_18] : memref<2x128xf32, #tpu.memory_space<vmem>>, vector<2x128xf32>
      tpu.vector_store %arg8[%c0_17, %c0_18], %19 {strides = array<i32>} : memref<2x128xf32, #tpu.memory_space<vmem>>, vector<2x128xf32>,
    } else {
    }
    %c0 = arith.constant 0 : index
    %c0_1 = arith.constant 0 : index
    %3 = vector.load %arg2[%c0, %c0_1] : memref<2x32xf32, #tpu.memory_space<vmem>>, vector<2x32xf32>
    %c0_2 = arith.constant 0 : index
    %c0_3 = arith.constant 0 : index
    %4 = vector.load %arg3[%c0_2, %c0_3] : memref<32x32xf32, #tpu.memory_space<vmem>>, vector<32x32xf32>
    %cst = arith.constant dense<0.000000e+00> : vector<2x32xf32>
    %5 = tpu.matmul %3, %4, %cst {dimension_numbers = #tpu.dot_dimension_numbers<[1], [0], [0], [1], [0, 0, 1, 1], [], []>} : vector<2x32xf32>, vector<32x32xf32>, vector<2x32xf32> -> vector<2x32xf32>
    %c0_4 = arith.constant 0 : index
    %c0_5 = arith.constant 0 : index
    %6 = vector.load %arg4[%c0_4, %c0_5] : memref<1x32xf32, #tpu.memory_space<vmem>>, vector<1x32xf32>
    %7 = vector.broadcast %6 : vector<1x32xf32> to vector<2x32xf32>
    %8 = arith.addf %5, %7 : vector<2x32xf32>
    %cst_6 = arith.constant 0.000000e+00 : f32
    %9 = vector.broadcast %cst_6 : f32 to vector<2x32xf32>
    %10 = arith.maximumf %8, %9 : vector<2x32xf32>
    %c0_7 = arith.constant 0 : index
    %c0_8 = arith.constant 0 : index
    %11 = vector.load %arg8[%c0_7, %c0_8] : memref<2x128xf32, #tpu.memory_space<vmem>>, vector<2x128xf32>
    %c0_9 = arith.constant 0 : index
    %c0_10 = arith.constant 0 : index
    %12 = vector.load %arg5[%c0_9, %c0_10] : memref<32x128xf32, #tpu.memory_space<vmem>>, vector<32x128xf32>
    %cst_11 = arith.constant dense<0.000000e+00> : vector<2x128xf32>
    %13 = tpu.matmul %10, %12, %cst_11 {dimension_numbers = #tpu.dot_dimension_numbers<[1], [0], [0], [1], [0, 0, 1, 1], [], []>} : vector<2x32xf32>, vector<32x128xf32>, vector<2x128xf32> -> vector<2x128xf32>
    %14 = arith.addf %11, %13 : vector<2x128xf32>
    %c0_12 = arith.constant 0 : index
    %c0_13 = arith.constant 0 : index
    %15 = vector.load %arg8[%c0_12, %c0_13] : memref<2x128xf32, #tpu.memory_space<vmem>>, vector<2x128xf32>
    tpu.vector_store %arg8[%c0_12, %c0_13], %14 {strides = array<i32>} : memref<2x128xf32, #tpu.memory_space<vmem>>, vector<2x128xf32>,
    %c0_i32_14 = arith.constant 0 : i32
    %16 = arith.cmpi eq, %arg1, %c0_i32_14 : i32
    %17 = arith.extui %16 : i1 to i32
    %c0_i32_15 = arith.constant 0 : i32
    %18 = arith.cmpi ne, %17, %c0_i32_15 : i32
    scf.if %18 {
      %c0_16 = arith.constant 0 : index
      %c0_17 = arith.constant 0 : index
      %19 = vector.load %arg8[%c0_16, %c0_17] : memref<2x128xf32, #tpu.memory_space<vmem>>, vector<2x128xf32>
      %c0_18 = arith.constant 0 : index
      %c0_19 = arith.constant 0 : index
      %20 = vector.load %arg6[%c0_18, %c0_19] : memref<1x128xf32, #tpu.memory_space<vmem>>, vector<1x128xf32>
      %21 = vector.broadcast %20 : vector<1x128xf32> to vector<2x128xf32>
      %22 = arith.addf %19, %21 : vector<2x128xf32>
      %c0_20 = arith.constant 0 : index
      %c0_21 = arith.constant 0 : index
      %23 = vector.load %arg7[%c0_20, %c0_21] : memref<2x128xf32, #tpu.memory_space<vmem>>, vector<2x128xf32>
      tpu.vector_store %arg7[%c0_20, %c0_21], %22 {strides = array<i32>} : memref<2x128xf32, #tpu.memory_space<vmem>>, vector<2x128xf32>,
    } else {
    }
    return
  }
  func.func @transform_0(%arg0: i32, %arg1: i32) -> (i32, i32) {
    %c0_i32 = arith.constant 0 : i32
    %c0_i32_0 = arith.constant 0 : i32
    return %arg0, %c0_i32 : i32, i32
  }
  func.func @transform_1(%arg0: i32, %arg1: i32) -> (i32, i32) {
    %c0_i32 = arith.constant 0 : i32
    %c0_i32_0 = arith.constant 0 : i32
    return %c0_i32, %arg1 : i32, i32
  }
  func.func @transform_2(%arg0: i32, %arg1: i32) -> (i32, i32) {
    %c0_i32 = arith.constant 0 : i32
    %c0_i32_0 = arith.constant 0 : i32
    return %c0_i32, %arg1 : i32, i32
  }
  func.func @transform_3(%arg0: i32, %arg1: i32) -> (i32, i32) {
    %c0_i32 = arith.constant 0 : i32
    %c0_i32_0 = arith.constant 0 : i32
    return %arg1, %c0_i32 : i32, i32
  }
  func.func @transform_4(%arg0: i32, %arg1: i32) -> (i32, i32) {
    %c0_i32 = arith.constant 0 : i32
    %c0_i32_0 = arith.constant 0 : i32
    %c0_i32_1 = arith.constant 0 : i32
    return %c0_i32, %c0_i32_0 : i32, i32
  }
  func.func @transform_5(%arg0: i32, %arg1: i32) -> (i32, i32) {
    %c0_i32 = arith.constant 0 : i32
    %c0_i32_0 = arith.constant 0 : i32
    return %arg0, %c0_i32 : i32, i32
  }
}

</mosaic_0001>

<llo_original>
// kernel: tpu_custom_call.1
$region0: #{tpu_custom_call.1}
  #allocation0 [shape = 'u32[]', space=smem, size = 0x4, offset = 0x4, fixed_abs, tag = 'smem constant byte address 0x4 - core index']
  #allocation1 [shape = 'u32[144,128]{1,0:T(1,128)}', space=vmem, size = 0x12000, scoped, tag = 'internal scratch']
  #allocation2 [shape = 'f32[2,128]{1,0:T(2,128)}', space=vmem, size = 0x400, scoped, tag = 'scratch operand']
  %s0 = inlined_call_operand.hbm [shape: f32[2,32], index: 0, kind: input, shape index: {}]
  %s1 = inlined_call_operand.hbm [shape: f32[32,32], index: 1, kind: input, shape index: {}]
  %s2 = inlined_call_operand.vmem [shape: f32[1,32], index: 2, kind: input, shape index: {}]
  %s3 = inlined_call_operand.hbm [shape: f32[32,128], index: 3, kind: input, shape index: {}]
  %s4 = inlined_call_operand.vmem [shape: f32[1,128], index: 4, kind: input, shape index: {}]
  %s5 = inlined_call_operand.hbm [shape: f32[2,128], index: 5, kind: output, shape index: {}]
  %s6 = sld [smem:[#allocation0]]
  $region50: #{tpu_custom_call.1} parent=0
    _
  %s8 = ssub.s32 1, %s6
  %s9 = scalar_select 0, %s8, %s6
  $region1: #{tpu_custom_call.1} parent=0
    #allocation3 [shape = 'u8[1024]{0}', space=vmem, size = 0x400, scoped, tag = 'input window, operand 0, single buffered']
    #allocation4 [shape = 's32[1]{0}', space=sflag, size = 0x4, scoped, tag = 'scoped memory for tpu_custom_call.1']
    #allocation5 [shape = 's32[1]{0}', space=sflag, size = 0x4, scoped, tag = 'scoped memory for tpu_custom_call.1']
    #allocation6 [shape = 'u8[16384]{0}', space=vmem, size = 0x4000, scoped, tag = 'input window, operand 1, single buffered']
    #allocation7 [shape = 's32[1]{0}', space=sflag, size = 0x4, scoped, tag = 'scoped memory for tpu_custom_call.1']
    #allocation8 [shape = 'u8[16384]{0}', space=vmem, size = 0x4000, scoped, tag = 'input window, operand 3, single buffered']
    #allocation9 [shape = 'u8[1024]{0}', space=vmem, size = 0x400, scoped, tag = 'output window, operand 0, single buffered']
    %10 = vsyncpa [#allocation4], 0
    %11 = vsyncpa [#allocation7], 0
    %12 = vsyncpa [#allocation5], 0
    // Predicated region
    $region2: #{tpu_custom_call.1} parent=1 // pred_check
      _
    $region3: #{tpu_custom_call.1} parent=1 // pred_check_branch
      %14 = sbr.rel (0) target = $region5
    $region4: #{tpu_custom_call.1} parent=1 // pred_region
      %s16 = ssub.s32 32, 32
      %17 = vsyncadd [#allocation4], %s16
      %s19 = sshll.u32 [#allocation3], 4
      %s20 = int_to_ptr.vmem [resolvable:$true] %s19
      %22 = dma.hbm_to_vmem [thread:$0]  %s0, 32, %s20, [#allocation4]
    $region5: #{tpu_custom_call.1} parent=1 // pred_fallthru
      _
    // Predicated region
    $region6: #{tpu_custom_call.1} parent=1 // pred_check
      _
    $region7: #{tpu_custom_call.1} parent=1 // pred_check_branch
      %24 = sbr.rel (0) target = $region9
    $region8: #{tpu_custom_call.1} parent=1 // pred_region
      %s26 = ssub.s32 512, 512
      %27 = vsyncadd [#allocation7], %s26
      %s28 = sshll.u32 [#allocation6], 4
      %s29 = int_to_ptr.vmem [resolvable:$true] %s28
      %34 = dma.hbm_to_vmem [thread:$0]  %s1, 512, %s29, [#allocation7], 128, 128, 8
    $region9: #{tpu_custom_call.1} parent=1 // pred_fallthru
      _
    // Predicated region
    $region10: #{tpu_custom_call.1} parent=1 // pred_check
      _
    $region11: #{tpu_custom_call.1} parent=1 // pred_check_branch
      %36 = sbr.rel (0) target = $region13
    $region12: #{tpu_custom_call.1} parent=1 // pred_region
      _
    $region13: #{tpu_custom_call.1} parent=1 // pred_fallthru
      _
    // Predicated region
    $region14: #{tpu_custom_call.1} parent=1 // pred_check
      _
    $region15: #{tpu_custom_call.1} parent=1 // pred_check_branch
      %38 = sbr.rel (0) target = $region17
    $region16: #{tpu_custom_call.1} parent=1 // pred_region
      %s40 = ssub.s32 512, 512
      %41 = vsyncadd [#allocation7], %s40
      %s42 = sshll.u32 [#allocation8], 4
      %s43 = int_to_ptr.vmem [resolvable:$true] %s42
      %48 = dma.hbm_to_vmem [thread:$0]  %s3, 512, %s43, [#allocation7], 128, 128, 8
    $region17: #{tpu_custom_call.1} parent=1 // pred_fallthru
      _
    // Predicated region
    $region18: #{tpu_custom_call.1} parent=1 // pred_check
      _
    $region19: #{tpu_custom_call.1} parent=1 // pred_check_branch
      %50 = sbr.rel (0) target = $region21
    $region20: #{tpu_custom_call.1} parent=1 // pred_region
      _
    $region21: #{tpu_custom_call.1} parent=1 // pred_fallthru
      _
    // Predicated region
    $region22: #{tpu_custom_call.1} parent=1 // pred_check
      _
    $region23: #{tpu_custom_call.1} parent=1 // pred_check_branch
      %52 = sbr.rel (0) target = $region25
    $region24: #{tpu_custom_call.1} parent=1 // pred_region
      %53 = dma.done [#allocation4], 32
    $region25: #{tpu_custom_call.1} parent=1 // pred_fallthru
      _
    // Predicated region
    $region26: #{tpu_custom_call.1} parent=1 // pred_check
      _
    $region27: #{tpu_custom_call.1} parent=1 // pred_check_branch
      %55 = sbr.rel (0) target = $region29
    $region28: #{tpu_custom_call.1} parent=1 // pred_region
      %56 = dma.done [#allocation7], 512
    $region29: #{tpu_custom_call.1} parent=1 // pred_fallthru
      _
    // Predicated region
    $region30: #{tpu_custom_call.1} parent=1 // pred_check
      _
    $region31: #{tpu_custom_call.1} parent=1 // pred_check_branch
      %58 = sbr.rel (0) target = $region33
    $region32: #{tpu_custom_call.1} parent=1 // pred_region
      %59 = dma.done [#allocation7], 512
    $region33: #{tpu_custom_call.1} parent=1 // pred_fallthru
      _
    %p60 = scmp.eq.s32.totalorder 0, 0
    // Predicated region
    $region34: #{tpu_custom_call.1} parent=1 // pred_check
      %p61 = pneg %p60
    $region35: #{tpu_custom_call.1} parent=1 // pred_check_branch
      %63 = sbr.rel (%p61) target = $region37
    $region36: #{tpu_custom_call.1} parent=1 // pred_region
      %64 = vst [vmem:[#allocation2] sm:$0x3] 0.0
    $region37: #{tpu_custom_call.1} parent=1 // pred_fallthru
      _
    %v65 = vld [vmem:[#allocation3] sm:$0x3]
    %v66 = vld [vmem:[#allocation6] sm:$0xff]
    %v67 = vld [vmem:[#allocation6 + $0x8] sm:$0xff]
    %v68 = vld [vmem:[#allocation6 + $0x10] sm:$0xff]
    %v69 = vld [vmem:[#allocation6 + $0x18] sm:$0xff]
    %v70 = vld [vmem:[%s2] sm:$0x1]
    %v72 = vlaneseq
    %v73 = vshrl.u32 %v72, 7
    %v74 = vsub.s32 0, %v73
    %v75 = vrot.slane %v70, %v74
    %vm77 = vcmask 261120
    %v79 = vsel %vm77, %v65, 0
    %81 = vmatprep.subr.mxu0 0.0
    %82 = vmatpush1.msra.mxu0 %v66
    %83 = vmatprep.subr.mxu0 0.0
    %84 = vmatpush1.msra.mxu0 %v67
    %85 = vmatprep.subr.mxu0 0.0
    %86 = vmatpush1.msra.mxu0 %v68
    %87 = vmatprep.subr.mxu0 0.0
    %88 = vmatpush1.msra.mxu0 %v69
    %89 = vmatprep.subr.mxu0 0.0
    %90 = vmatpush1.msra.mxu0 0.0
    %91 = vmatprep.subr.mxu0 0.0
    %92 = vmatpush1.msra.mxu0 0.0
    %93 = vmatprep.subr.mxu0 0.0
    %94 = vmatpush1.msra.mxu0 0.0
    %95 = vmatprep.subr.mxu0 0.0
    %96 = vmatpush1.msra.mxu0 0.0
    %97 = vmatprep.subr.mxu0 0.0
    %98 = vmatpush1.msra.mxu0 0.0
    %99 = vmatprep.subr.mxu0 0.0
    %100 = vmatpush1.msra.mxu0 0.0
    %101 = vmatprep.subr.mxu0 0.0
    %102 = vmatpush1.msra.mxu0 0.0
    %103 = vmatprep.subr.mxu0 0.0
    %104 = vmatpush1.msra.mxu0 0.0
    %105 = vmatprep.subr.mxu0 0.0
    %106 = vmatpush1.msra.mxu0 0.0
    %107 = vmatprep.subr.mxu0 0.0
    %108 = vmatpush1.msra.mxu0 0.0
    %109 = vmatprep.subr.mxu0 0.0
    %110 = vmatpush1.msra.mxu0 0.0
    %111 = vmatprep.subr.mxu0 0.0
    %112 = vmatpush1.msra.mxu0 0.0
    %113 = vmatprep.subr.mxu0 0.0
    %114 = vmatpush1.msra.mxu0 0.0
    %115 = vmatprep.subr.mxu0 0.0
    %116 = vmatpush1.msra.mxu0 0.0
    %117 = vmatprep.subr.mxu0 0.0
    %118 = vmatpush1.msra.mxu0 0.0
    %119 = vmatprep.subr.mxu0 0.0
    %120 = vmatpush1.msra.mxu0 0.0
    %121 = vmatprep.subr.mxu0 0.0
    %122 = vmatpush1.msra.mxu0 0.0
    %123 = vmatprep.subr.mxu0 0.0
    %124 = vmatpush1.msra.mxu0 0.0
    %125 = vmatprep.subr.mxu0 0.0
    %126 = vmatpush1.msra.mxu0 0.0
    %127 = vmatprep.subr.mxu0 0.0
    %128 = vmatpush1.msra.mxu0 0.0
    %129 = vmatprep.subr.mxu0 0.0
    %130 = vmatpush1.msra.mxu0 0.0
    %131 = vmatprep.subr.mxu0 0.0
    %132 = vmatpush1.msra.mxu0 0.0
    %133 = vmatprep.subr.mxu0 0.0
    %134 = vmatpush1.msra.mxu0 0.0
    %135 = vmatprep.subr.mxu0 0.0
    %136 = vmatpush1.msra.mxu0 0.0
    %137 = vmatprep.subr.mxu0 0.0
    %138 = vmatpush1.msra.mxu0 0.0
    %139 = vmatprep.subr.mxu0 0.0
    %140 = vmatpush1.msra.mxu0 0.0
    %141 = vmatprep.subr.mxu0 0.0
    %142 = vmatpush1.msra.mxu0 0.0
    %143 = vmatprep.subr.mxu0 0.0
    %144 = vmatpush1.msra.mxu0 0.0
    %145 = vmatprep.mubr.f32.mxu0 0.0
    %146 = vmatmul.mubr.f32.gmra.mrb[0].mxu0 %v79
    %v147 = vpop.f32.mrb[0].mxu0
    %v148 = vadd.f32 %v75, %v147
    %v149 = vpop.f32.mrb[0].mxu0
    %150 = vdwg.mxu0
    %v151 = vmax.f32 %v148, 0.0
    %v152 = vld [vmem:[#allocation2] sm:$0x3]
    %v153 = vld [vmem:[#allocation8] sm:$0xff]
    %v154 = vld [vmem:[#allocation8 + $0x8] sm:$0xff]
    %v155 = vld [vmem:[#allocation8 + $0x10] sm:$0xff]
    %v156 = vld [vmem:[#allocation8 + $0x18] sm:$0xff]
    %v158 = vsel %vm77, %v151, 0
    %160 = vmatprep.subr.mxu0 0.0
    %161 = vmatpush1.msra.mxu0 %v153
    %162 = vmatprep.subr.mxu0 0.0
    %163 = vmatpush1.msra.mxu0 %v154
    %164 = vmatprep.subr.mxu0 0.0
    %165 = vmatpush1.msra.mxu0 %v155
    %166 = vmatprep.subr.mxu0 0.0
    %167 = vmatpush1.msra.mxu0 %v156
    %168 = vmatprep.subr.mxu0 0.0
    %169 = vmatpush1.msra.mxu0 0.0
    %170 = vmatprep.subr.mxu0 0.0
    %171 = vmatpush1.msra.mxu0 0.0
    %172 = vmatprep.subr.mxu0 0.0
    %173 = vmatpush1.msra.mxu0 0.0
    %174 = vmatprep.subr.mxu0 0.0
    %175 = vmatpush1.msra.mxu0 0.0
    %176 = vmatprep.subr.mxu0 0.0
    %177 = vmatpush1.msra.mxu0 0.0
    %178 = vmatprep.subr.mxu0 0.0
    %179 = vmatpush1.msra.mxu0 0.0
    %180 = vmatprep.subr.mxu0 0.0
    %181 = vmatpush1.msra.mxu0 0.0
    %182 = vmatprep.subr.mxu0 0.0
    %183 = vmatpush1.msra.mxu0 0.0
    %184 = vmatprep.subr.mxu0 0.0
    %185 = vmatpush1.msra.mxu0 0.0
    %186 = vmatprep.subr.mxu0 0.0
    %187 = vmatpush1.msra.mxu0 0.0
    %188 = vmatprep.subr.mxu0 0.0
    %189 = vmatpush1.msra.mxu0 0.0
    %190 = vmatprep.subr.mxu0 0.0
    %191 = vmatpush1.msra.mxu0 0.0
    %192 = vmatprep.subr.mxu0 0.0
    %193 = vmatpush1.msra.mxu0 0.0
    %194 = vmatprep.subr.mxu0 0.0
    %195 = vmatpush1.msra.mxu0 0.0
    %196 = vmatprep.subr.mxu0 0.0
    %197 = vmatpush1.msra.mxu0 0.0
    %198 = vmatprep.subr.mxu0 0.0
    %199 = vmatpush1.msra.mxu0 0.0
    %200 = vmatprep.subr.mxu0 0.0
    %201 = vmatpush1.msra.mxu0 0.0
    %202 = vmatprep.subr.mxu0 0.0
    %203 = vmatpush1.msra.mxu0 0.0
    %204 = vmatprep.subr.mxu0 0.0
    %205 = vmatpush1.msra.mxu0 0.0
    %206 = vmatprep.subr.mxu0 0.0
    %207 = vmatpush1.msra.mxu0 0.0
    %208 = vmatprep.subr.mxu0 0.0
    %209 = vmatpush1.msra.mxu0 0.0
    %210 = vmatprep.subr.mxu0 0.0
    %211 = vmatpush1.msra.mxu0 0.0
    %212 = vmatprep.subr.mxu0 0.0
    %213 = vmatpush1.msra.mxu0 0.0
    %214 = vmatprep.subr.mxu0 0.0
    %215 = vmatpush1.msra.mxu0 0.0
    %216 = vmatprep.subr.mxu0 0.0
    %217 = vmatpush1.msra.mxu0 0.0
    %218 = vmatprep.subr.mxu0 0.0
    %219 = vmatpush1.msra.mxu0 0.0
    %220 = vmatprep.subr.mxu0 0.0
    %221 = vmatpush1.msra.mxu0 0.0
    %222 = vmatprep.subr.mxu0 0.0
    %223 = vmatpush1.msra.mxu0 0.0
    %224 = vmatprep.mubr.f32.mxu0 0.0
    %225 = vmatmul.mubr.f32.gmra.mrb[0].mxu0 %v158
    %v226 = vpop.f32.mrb[0].mxu0
    %v227 = vadd.f32 0.0, %v226
    %v228 = vpop.f32.mrb[0].mxu0
    %229 = vdwg.mxu0
    %v230 = vadd.f32 %v152, %v227
    %231 = vst [vmem:[#allocation2] sm:$0x3] %v230
    // Predicated region
    $region38: #{tpu_custom_call.1} parent=1 // pred_check
      %p232 = pneg %p60
    $region39: #{tpu_custom_call.1} parent=1 // pred_check_branch
      %234 = sbr.rel (%p232) target = $region41
    $region40: #{tpu_custom_call.1} parent=1 // pred_region
      %v235 = vld [vmem:[#allocation2] sm:$0x3]
      %v236 = vld [vmem:[%s4] sm:$0x1]
      %v238 = vlaneseq
      %v239 = vshrl.u32 %v238, 7
      %v240 = vsub.s32 0, %v239
      %v241 = vrot.slane %v236, %v240
      %v243 = vadd.f32 %v235, %v241
      %244 = vst [vmem:[#allocation9] sm:$0x3] %v243
    $region41: #{tpu_custom_call.1} parent=1 // pred_fallthru
      _
    // Predicated region
    $region42: #{tpu_custom_call.1} parent=1 // pred_check
      _
    $region43: #{tpu_custom_call.1} parent=1 // pred_check_branch
      %246 = sbr.rel (0) target = $region45
    $region44: #{tpu_custom_call.1} parent=1 // pred_region
      %s248 = ssub.s32 32, 32
      %249 = vsyncadd [#allocation5], %s248
      %s251 = sshll.u32 [#allocation9], 4
      %s252 = int_to_ptr.vmem [resolvable:$true] %s251
      %254 = dma.vmem_to_hbm [thread:$0]  %s252, 32, %s5, [#allocation5]
    $region45: #{tpu_custom_call.1} parent=1 // pred_fallthru
      _
    // Predicated region
    $region46: #{tpu_custom_call.1} parent=1 // pred_check
      _
    $region47: #{tpu_custom_call.1} parent=1 // pred_check_branch
      %256 = sbr.rel (0) target = $region49
    $region48: #{tpu_custom_call.1} parent=1 // pred_region
      %257 = dma.done [#allocation5], 32
    $region49: #{tpu_custom_call.1} parent=1 // pred_fallthru
      _
    %258 = vsyncpa [#allocation4], 1
    %259 = vsyncpa [#allocation7], 1
    %260 = vsyncpa [#allocation5], 1

// kernel: tpu_custom_call.1
$region0: #{tpu_custom_call.1}
  #allocation0 [shape = 'u32[]', space=smem, size = 0x4, offset = 0x4, fixed_abs, tag = 'smem constant byte address 0x4 - core index']
  #allocation1 [shape = 'u32[144,128]{1,0:T(1,128)}', space=vmem, size = 0x12000, scoped, tag = 'internal scratch']
  #allocation2 [shape = 'f32[2,128]{1,0:T(2,128)}', space=vmem, size = 0x400, scoped, tag = 'scratch operand']
  %s0 = inlined_call_operand.hbm [shape: f32[2,32], index: 0, kind: input, shape index: {}]
  %s1 = inlined_call_operand.hbm [shape: f32[32,32], index: 1, kind: input, shape index: {}]
  %s2 = inlined_call_operand.vmem [shape: f32[1,32], index: 2, kind: input, shape index: {}]
  %s3 = inlined_call_operand.hbm [shape: f32[32,128], index: 3, kind: input, shape index: {}]
  %s4 = inlined_call_operand.vmem [shape: f32[1,128], index: 4, kind: input, shape index: {}]
  %s5 = inlined_call_operand.hbm [shape: f32[2,128], index: 5, kind: output, shape index: {}]
  %s6 = sld [smem:[#allocation0]]
  $region50: #{tpu_custom_call.1} parent=0
    _
  %s8 = ssub.s32 1, %s6
  %s9 = scalar_select 0, %s8, %s6
  $region1: #{tpu_custom_call.1} parent=0
    #allocation3 [shape = 'u8[1024]{0}', space=vmem, size = 0x400, scoped, tag = 'input window, operand 0, single buffered']
    #allocation4 [shape = 's32[1]{0}', space=sflag, size = 0x4, scoped, tag = 'scoped memory for tpu_custom_call.1']
    #allocation5 [shape = 's32[1]{0}', space=sflag, size = 0x4, scoped, tag = 'scoped memory for tpu_custom_call.1']
    #allocation6 [shape = 'u8[16384]{0}', space=vmem, size = 0x4000, scoped, tag = 'input window, operand 1, single buffered']
    #allocation7 [shape = 's32[1]{0}', space=sflag, size = 0x4, scoped, tag = 'scoped memory for tpu_custom_call.1']
    #allocation8 [shape = 'u8[16384]{0}', space=vmem, size = 0x4000, scoped, tag = 'input window, operand 3, single buffered']
    #allocation9 [shape = 'u8[1024]{0}', space=vmem, size = 0x400, scoped, tag = 'output window, operand 0, single buffered']
    %10 = vsyncpa [#allocation4], 0
    %11 = vsyncpa [#allocation7], 0
    %12 = vsyncpa [#allocation5], 0
    // Predicated region
    $region2: #{tpu_custom_call.1} parent=1 // pred_check
      _
    $region3: #{tpu_custom_call.1} parent=1 // pred_check_branch
      %14 = sbr.rel (0) target = $region5
    $region4: #{tpu_custom_call.1} parent=1 // pred_region
      %s16 = ssub.s32 32, 32
      %17 = vsyncadd [#allocation4], %s16
      %s19 = sshll.u32 [#allocation3], 4
      %s20 = int_to_ptr.vmem [resolvable:$true] %s19
      %22 = dma.hbm_to_vmem [thread:$0]  %s0, 32, %s20, [#allocation4]
    $region5: #{tpu_custom_call.1} parent=1 // pred_fallthru
      _
    // Predicated region
    $region6: #{tpu_custom_call.1} parent=1 // pred_check
      _
    $region7: #{tpu_custom_call.1} parent=1 // pred_check_branch
      %24 = sbr.rel (0) target = $region9
    $region8: #{tpu_custom_call.1} parent=1 // pred_region
      %s26 = ssub.s32 512, 512
      %27 = vsyncadd [#allocation7], %s26
      %s28 = sshll.u32 [#allocation6], 4
      %s29 = int_to_ptr.vmem [resolvable:$true] %s28
      %34 = dma.hbm_to_vmem [thread:$0]  %s1, 512, %s29, [#allocation7], 128, 128, 8
    $region9: #{tpu_custom_call.1} parent=1 // pred_fallthru
      _
    // Predicated region
    $region10: #{tpu_custom_call.1} parent=1 // pred_check
      _
    $region11: #{tpu_custom_call.1} parent=1 // pred_check_branch
      %36 = sbr.rel (0) target = $region13
    $region12: #{tpu_custom_call.1} parent=1 // pred_region
      _
    $region13: #{tpu_custom_call.1} parent=1 // pred_fallthru
      _
    // Predicated region
    $region14: #{tpu_custom_call.1} parent=1 // pred_check
      _
    $region15: #{tpu_custom_call.1} parent=1 // pred_check_branch
      %38 = sbr.rel (0) target = $region17
    $region16: #{tpu_custom_call.1} parent=1 // pred_region
      %s40 = ssub.s32 512, 512
      %41 = vsyncadd [#allocation7], %s40
      %s42 = sshll.u32 [#allocation8], 4
      %s43 = int_to_ptr.vmem [resolvable:$true] %s42
      %48 = dma.hbm_to_vmem [thread:$0]  %s3, 512, %s43, [#allocation7], 128, 128, 8
    $region17: #{tpu_custom_call.1} parent=1 // pred_fallthru
      _
    // Predicated region
    $region18: #{tpu_custom_call.1} parent=1 // pred_check
      _
    $region19: #{tpu_custom_call.1} parent=1 // pred_check_branch
      %50 = sbr.rel (0) target = $region21
    $region20: #{tpu_custom_call.1} parent=1 // pred_region
      _
    $region21: #{tpu_custom_call.1} parent=1 // pred_fallthru
      _
    // Predicated region
    $region22: #{tpu_custom_call.1} parent=1 // pred_check
      _
    $region23: #{tpu_custom_call.1} parent=1 // pred_check_branch
      %52 = sbr.rel (0) target = $region25
    $region24: #{tpu_custom_call.1} parent=1 // pred_region
      %53 = dma.done [#allocation4], 32
    $region25: #{tpu_custom_call.1} parent=1 // pred_fallthru
      _
    // Predicated region
    $region26: #{tpu_custom_call.1} parent=1 // pred_check
      _
    $region27: #{tpu_custom_call.1} parent=1 // pred_check_branch
      %55 = sbr.rel (0) target = $region29
    $region28: #{tpu_custom_call.1} parent=1 // pred_region
      %56 = dma.done [#allocation7], 512
    $region29: #{tpu_custom_call.1} parent=1 // pred_fallthru
      _
    // Predicated region
    $region30: #{tpu_custom_call.1} parent=1 // pred_check
      _
    $region31: #{tpu_custom_call.1} parent=1 // pred_check_branch
      %58 = sbr.rel (0) target = $region33
    $region32: #{tpu_custom_call.1} parent=1 // pred_region
      %59 = dma.done [#allocation7], 512
    $region33: #{tpu_custom_call.1} parent=1 // pred_fallthru
      _
    %p60 = scmp.eq.s32.totalorder 0, 0
    // Predicated region
    $region34: #{tpu_custom_call.1} parent=1 // pred_check
      %p61 = pneg %p60
    $region35: #{tpu_custom_call.1} parent=1 // pred_check_branch
      %63 = sbr.rel (%p61) target = $region37
    $region36: #{tpu_custom_call.1} parent=1 // pred_region
      %64 = vst [vmem:[#allocation2] sm:$0x3] 0.0
    $region37: #{tpu_custom_call.1} parent=1 // pred_fallthru
      _
    %v65 = vld [vmem:[#allocation3] sm:$0x3]
    %v66 = vld [vmem:[#allocation6] sm:$0xff]
    %v67 = vld [vmem:[#allocation6 + $0x8] sm:$0xff]
    %v68 = vld [vmem:[#allocation6 + $0x10] sm:$0xff]
    %v69 = vld [vmem:[#allocation6 + $0x18] sm:$0xff]
    %v70 = vld [vmem:[%s2] sm:$0x1]
    %v72 = vlaneseq
    %v73 = vshrl.u32 %v72, 7
    %v74 = vsub.s32 0, %v73
    %v75 = vrot.slane %v70, %v74
    %vm77 = vcmask 261120
    %v79 = vsel %vm77, %v65, 0
    %81 = vmatprep.subr.mxu0 0.0
    %82 = vmatpush1.msra.mxu0 %v66
    %83 = vmatprep.subr.mxu0 0.0
    %84 = vmatpush1.msra.mxu0 %v67
    %85 = vmatprep.subr.mxu0 0.0
    %86 = vmatpush1.msra.mxu0 %v68
    %87 = vmatprep.subr.mxu0 0.0
    %88 = vmatpush1.msra.mxu0 %v69
    %89 = vmatprep.subr.mxu0 0.0
    %90 = vmatpush1.msra.mxu0 0.0
    %91 = vmatprep.subr.mxu0 0.0
    %92 = vmatpush1.msra.mxu0 0.0
    %93 = vmatprep.subr.mxu0 0.0
    %94 = vmatpush1.msra.mxu0 0.0
    %95 = vmatprep.subr.mxu0 0.0
    %96 = vmatpush1.msra.mxu0 0.0
    %97 = vmatprep.subr.mxu0 0.0
    %98 = vmatpush1.msra.mxu0 0.0
    %99 = vmatprep.subr.mxu0 0.0
    %100 = vmatpush1.msra.mxu0 0.0
    %101 = vmatprep.subr.mxu0 0.0
    %102 = vmatpush1.msra.mxu0 0.0
    %103 = vmatprep.subr.mxu0 0.0
    %104 = vmatpush1.msra.mxu0 0.0
    %105 = vmatprep.subr.mxu0 0.0
    %106 = vmatpush1.msra.mxu0 0.0
    %107 = vmatprep.subr.mxu0 0.0
    %108 = vmatpush1.msra.mxu0 0.0
    %109 = vmatprep.subr.mxu0 0.0
    %110 = vmatpush1.msra.mxu0 0.0
    %111 = vmatprep.subr.mxu0 0.0
    %112 = vmatpush1.msra.mxu0 0.0
    %113 = vmatprep.subr.mxu0 0.0
    %114 = vmatpush1.msra.mxu0 0.0
    %115 = vmatprep.subr.mxu0 0.0
    %116 = vmatpush1.msra.mxu0 0.0
    %117 = vmatprep.subr.mxu0 0.0
    %118 = vmatpush1.msra.mxu0 0.0
    %119 = vmatprep.subr.mxu0 0.0
    %120 = vmatpush1.msra.mxu0 0.0
    %121 = vmatprep.subr.mxu0 0.0
    %122 = vmatpush1.msra.mxu0 0.0
    %123 = vmatprep.subr.mxu0 0.0
    %124 = vmatpush1.msra.mxu0 0.0
    %125 = vmatprep.subr.mxu0 0.0
    %126 = vmatpush1.msra.mxu0 0.0
    %127 = vmatprep.subr.mxu0 0.0
    %128 = vmatpush1.msra.mxu0 0.0
    %129 = vmatprep.subr.mxu0 0.0
    %130 = vmatpush1.msra.mxu0 0.0
    %131 = vmatprep.subr.mxu0 0.0
    %132 = vmatpush1.msra.mxu0 0.0
    %133 = vmatprep.subr.mxu0 0.0
    %134 = vmatpush1.msra.mxu0 0.0
    %135 = vmatprep.subr.mxu0 0.0
    %136 = vmatpush1.msra.mxu0 0.0
    %137 = vmatprep.subr.mxu0 0.0
    %138 = vmatpush1.msra.mxu0 0.0
    %139 = vmatprep.subr.mxu0 0.0
    %140 = vmatpush1.msra.mxu0 0.0
    %141 = vmatprep.subr.mxu0 0.0
    %142 = vmatpush1.msra.mxu0 0.0
    %143 = vmatprep.subr.mxu0 0.0
    %144 = vmatpush1.msra.mxu0 0.0
    %145 = vmatprep.mubr.f32.mxu0 0.0
    %146 = vmatmul.mubr.f32.gmra.mrb[0].mxu0 %v79
    %v147 = vpop.f32.mrb[0].mxu0
    %v148 = vadd.f32 %v75, %v147
    %v149 = vpop.f32.mrb[0].mxu0
    %150 = vdwg.mxu0
    %v151 = vmax.f32 %v148, 0.0
    %v152 = vld [vmem:[#allocation2] sm:$0x3]
    %v153 = vld [vmem:[#allocation8] sm:$0xff]
    %v154 = vld [vmem:[#allocation8 + $0x8] sm:$0xff]
    %v155 = vld [vmem:[#allocation8 + $0x10] sm:$0xff]
    %v156 = vld [vmem:[#allocation8 + $0x18] sm:$0xff]
    %v158 = vsel %vm77, %v151, 0
    %160 = vmatprep.subr.mxu0 0.0
    %161 = vmatpush1.msra.mxu0 %v153
    %162 = vmatprep.subr.mxu0 0.0
    %163 = vmatpush1.msra.mxu0 %v154
    %164 = vmatprep.subr.mxu0 0.0
    %165 = vmatpush1.msra.mxu0 %v155
    %166 = vmatprep.subr.mxu0 0.0
    %167 = vmatpush1.msra.mxu0 %v156
    %168 = vmatprep.subr.mxu0 0.0
    %169 = vmatpush1.msra.mxu0 0.0
    %170 = vmatprep.subr.mxu0 0.0
    %171 = vmatpush1.msra.mxu0 0.0
    %172 = vmatprep.subr.mxu0 0.0
    %173 = vmatpush1.msra.mxu0 0.0
    %174 = vmatprep.subr.mxu0 0.0
    %175 = vmatpush1.msra.mxu0 0.0
    %176 = vmatprep.subr.mxu0 0.0
    %177 = vmatpush1.msra.mxu0 0.0
    %178 = vmatprep.subr.mxu0 0.0
    %179 = vmatpush1.msra.mxu0 0.0
    %180 = vmatprep.subr.mxu0 0.0
    %181 = vmatpush1.msra.mxu0 0.0
    %182 = vmatprep.subr.mxu0 0.0
    %183 = vmatpush1.msra.mxu0 0.0
    %184 = vmatprep.subr.mxu0 0.0
    %185 = vmatpush1.msra.mxu0 0.0
    %186 = vmatprep.subr.mxu0 0.0
    %187 = vmatpush1.msra.mxu0 0.0
    %188 = vmatprep.subr.mxu0 0.0
    %189 = vmatpush1.msra.mxu0 0.0
    %190 = vmatprep.subr.mxu0 0.0
    %191 = vmatpush1.msra.mxu0 0.0
    %192 = vmatprep.subr.mxu0 0.0
    %193 = vmatpush1.msra.mxu0 0.0
    %194 = vmatprep.subr.mxu0 0.0
    %195 = vmatpush1.msra.mxu0 0.0
    %196 = vmatprep.subr.mxu0 0.0
    %197 = vmatpush1.msra.mxu0 0.0
    %198 = vmatprep.subr.mxu0 0.0
    %199 = vmatpush1.msra.mxu0 0.0
    %200 = vmatprep.subr.mxu0 0.0
    %201 = vmatpush1.msra.mxu0 0.0
    %202 = vmatprep.subr.mxu0 0.0
    %203 = vmatpush1.msra.mxu0 0.0
    %204 = vmatprep.subr.mxu0 0.0
    %205 = vmatpush1.msra.mxu0 0.0
    %206 = vmatprep.subr.mxu0 0.0
    %207 = vmatpush1.msra.mxu0 0.0
    %208 = vmatprep.subr.mxu0 0.0
    %209 = vmatpush1.msra.mxu0 0.0
    %210 = vmatprep.subr.mxu0 0.0
    %211 = vmatpush1.msra.mxu0 0.0
    %212 = vmatprep.subr.mxu0 0.0
    %213 = vmatpush1.msra.mxu0 0.0
    %214 = vmatprep.subr.mxu0 0.0
    %215 = vmatpush1.msra.mxu0 0.0
    %216 = vmatprep.subr.mxu0 0.0
    %217 = vmatpush1.msra.mxu0 0.0
    %218 = vmatprep.subr.mxu0 0.0
    %219 = vmatpush1.msra.mxu0 0.0
    %220 = vmatprep.subr.mxu0 0.0
    %221 = vmatpush1.msra.mxu0 0.0
    %222 = vmatprep.subr.mxu0 0.0
    %223 = vmatpush1.msra.mxu0 0.0
    %224 = vmatprep.mubr.f32.mxu0 0.0
    %225 = vmatmul.mubr.f32.gmra.mrb[0].mxu0 %v158
    %v226 = vpop.f32.mrb[0].mxu0
    %v227 = vadd.f32 0.0, %v226
    %v228 = vpop.f32.mrb[0].mxu0
    %229 = vdwg.mxu0
    %v230 = vadd.f32 %v152, %v227
    %231 = vst [vmem:[#allocation2] sm:$0x3] %v230
    // Predicated region
    $region38: #{tpu_custom_call.1} parent=1 // pred_check
      %p232 = pneg %p60
    $region39: #{tpu_custom_call.1} parent=1 // pred_check_branch
      %234 = sbr.rel (%p232) target = $region41
    $region40: #{tpu_custom_call.1} parent=1 // pred_region
      %v235 = vld [vmem:[#allocation2] sm:$0x3]
      %v236 = vld [vmem:[%s4] sm:$0x1]
      %v238 = vlaneseq
      %v239 = vshrl.u32 %v238, 7
      %v240 = vsub.s32 0, %v239
      %v241 = vrot.slane %v236, %v240
      %v243 = vadd.f32 %v235, %v241
      %244 = vst [vmem:[#allocation9] sm:$0x3] %v243
    $region41: #{tpu_custom_call.1} parent=1 // pred_fallthru
      _
    // Predicated region
    $region42: #{tpu_custom_call.1} parent=1 // pred_check
      _
    $region43: #{tpu_custom_call.1} parent=1 // pred_check_branch
      %246 = sbr.rel (0) target = $region45
    $region44: #{tpu_custom_call.1} parent=1 // pred_region
      %s248 = ssub.s32 32, 32
      %249 = vsyncadd [#allocation5], %s248
      %s251 = sshll.u32 [#allocation9], 4
      %s252 = int_to_ptr.vmem [resolvable:$true] %s251
      %254 = dma.vmem_to_hbm [thread:$0]  %s252, 32, %s5, [#allocation5]
    $region45: #{tpu_custom_call.1} parent=1 // pred_fallthru
      _
    // Predicated region
    $region46: #{tpu_custom_call.1} parent=1 // pred_check
      _
    $region47: #{tpu_custom_call.1} parent=1 // pred_check_branch
      %256 = sbr.rel (0) target = $region49
    $region48: #{tpu_custom_call.1} parent=1 // pred_region
      %257 = dma.done [#allocation5], 32
    $region49: #{tpu_custom_call.1} parent=1 // pred_fallthru
      _
    %258 = vsyncpa [#allocation4], 1
    %259 = vsyncpa [#allocation7], 1
    %260 = vsyncpa [#allocation5], 1

</llo_original>
